<compile_context>
chip_gen: v6e
topology: v6e:2x2x1
jax: 0.10.0
libtpu: 0.0.40
codegen_flags: <defaults>
</compile_context>

<pallas_src>
import functools

import numpy as np

import jax
import jax.numpy as jnp
from jax.experimental import pallas as pl
from jax.experimental.pallas import tpu as pltpu

BN_EPS = 1e-5          # nn.BatchNorm1d default eps
STATS_ROWS = 8         # lane/sublane-dense stats output tile
STATS_LANES = 128


def _round_up(n, m):
  return ((n + m - 1) // m) * m


def _full_spec(shape):
  # whole-array block, trivial grid=(1,)
  return pl.BlockSpec(shape, lambda i, _nd=len(shape): (0,) * _nd)


# ---------------------------------------------------------------------------
# Single fused kernel.
#   scal_ref   : (2,) SMEM      [1/n, 1/max(n-1,1)] with n = B*Lout (real rows)
#   x_ref      : (Bp, L)        input (batch zero-padded to multiple of 8)
#   m_ref      : (L, Fp)        banded conv-as-matmul matrix (bf16), Fp = pad128(C*Lout)
#   p_ref      : (Fp, C)        flat-column -> channel pooling (one-hot, zero pad rows)
#   pt_ref     : (C, Fp)        channel -> flat-column broadcast (P^T)
#   gamma_ref  : (1, C)         BN weight
#   beta_ref   : (1, C)         BN bias
#   w1/b1 ...  : fc weights (bf16), transposed + zero-padded to 128-lane columns
#   out_ref    : (Bp, OUTp)     lane-dense padded logits
#   stats_ref  : (8, 128)       row 0 = batch mean, row 1 = unbiased batch var (lanes 0:C)
# ---------------------------------------------------------------------------
def _cnn_fused_kernel(scal_ref, x_ref, m_ref, p_ref, pt_ref, gamma_ref, beta_ref,
                      w1_ref, b1_ref, w2_ref, b2_ref, w3_ref, b3_ref,
                      out_ref, stats_ref):
  f32 = jnp.float32
  inv_n = scal_ref[0]
  inv_nm1 = scal_ref[1]

  # Conv1d as one matmul, already in torch flatten order (col = c*Lout + t).
  # INVARIANT: padded batch rows of x are exactly zero, so padded conv rows are
  # exactly zero and the one-pass statistics below need no row mask.
  conv = jnp.dot(x_ref[...], m_ref[...].astype(f32),
                 preferred_element_type=f32)                           # (Bp, Fp)

  # ---- one-pass BN stats: single pooling matmul for sum and sum-of-squares ----
  bp = conv.shape[0]
  both = jnp.concatenate([conv, conv * conv], axis=0)                  # (2*Bp, Fp)
  pooled = jnp.dot(both, p_ref[...], preferred_element_type=f32)       # (2*Bp, C)
  s = jnp.sum(pooled[:bp, :], axis=0, keepdims=True)                   # (1, C)  Σx
  ss = jnp.sum(pooled[bp:, :], axis=0, keepdims=True)                  # (1, C)  Σx²
  mean_c = s * inv_n
  var_b = ss * inv_n - mean_c * mean_c     # biased: used to normalize (torch training)
  var_u = (ss - s * mean_c) * inv_nm1      # unbiased: what torch feeds running_var
                                           # (n==1 guarded in wrapper; torch would NaN)

  # ---- fused per-channel scale/shift, broadcast with ONE (2,C)@(C,Fp) matmul ----
  scale_c = gamma_ref[...] * jax.lax.rsqrt(var_b + BN_EPS)             # (1, C)
  shift_c = beta_ref[...] - mean_c * scale_c                           # (1, C)
  ss_flat = jnp.dot(jnp.concatenate([scale_c, shift_c], axis=0),
                    pt_ref[...], preferred_element_type=f32)           # (2, Fp)

  # ---- BN apply + ReLU; flatten is implicit (already (Bp, C*Lout)) ----
  h = jnp.maximum(conv * ss_flat[0:1, :] + ss_flat[1:2, :], 0.0)       # (Bp, Fp)

  # ---- fc1 -> ReLU -> fc2 -> ReLU -> fc3 (all 128-lane padded outputs) ----
  a1 = jnp.maximum(jnp.dot(h, w1_ref[...].astype(f32),
                           preferred_element_type=f32) + b1_ref[...], 0.0)
  a2 = jnp.maximum(jnp.dot(a1, w2_ref[...].astype(f32),
                           preferred_element_type=f32) + b2_ref[...], 0.0)
  out_ref[...] = (jnp.dot(a2, w3_ref[...].astype(f32),
                          preferred_element_type=f32) + b3_ref[...])

  # ---- BN stats: single unmasked lane/sublane-dense (8,128) store ----
  c = mean_c.shape[1]
  mv = jnp.concatenate(
      [mean_c, var_u, jnp.zeros((STATS_ROWS - 2, c), f32)], axis=0)    # (8, C)
  stats_ref[...] = jnp.concatenate(
      [mv, jnp.zeros((STATS_ROWS, STATS_LANES - c), f32)], axis=1)     # (8, 128)


# ---------------------------------------------------------------------------
# One-time parameter preprocessing (hoisted out of the forward path).
# Matmul weights are stored in `weight_dtype` (bf16 by default) to halve the
# weight-DMA prologue; all in-kernel math stays f32.
# ---------------------------------------------------------------------------
def prepare_params(params, input_size, weight_dtype=jnp.bfloat16):
  conv_w = np.asarray(params["conv_w"], np.float32)          # (C, 1, K)
  C, _, K = conv_w.shape
  L = int(input_size)
  Lout = L - K + 1
  F = C * Lout
  Fp = _round_up(F, 128)

  w1, b1 = params["fc1_w"], params["fc1_b"]                  # (H1, F), (H1,)
  w2, b2 = params["fc2_w"], params["fc2_b"]                  # (H2, H1), (H2,)
  w3, b3 = params["fc3_w"], params["fc3_b"]                  # (OUT, H2), (OUT,)
  H1, H2, OUT = w1.shape[0], w2.shape[0], w3.shape[0]
  H1p, H2p, OUTp = _round_up(H1, 128), _round_up(H2, 128), _round_up(OUT, 128)

  # Banded conv matrix: M[l, c*Lout + t] = conv_w[c, 0, l - t] if 0 <= l-t < K.
  # Zero-padded columns F..Fp are mathematically inert.
  w = conv_w.reshape(C, K)
  l_idx = np.arange(L)[:, None, None]
  k_idx = np.arange(K)[None, :, None]
  t_idx = np.arange(Lout)[None, None, :]
  S = (l_idx == t_idx + k_idx).astype(np.float32)            # (L, K, Lout)
  M = np.einsum("ck,lkt->lct", w, S).reshape(L, F)
  M = np.pad(M, ((0, 0), (0, Fp - F)))

  # Channel pooling / broadcast matrices for the flat (c*Lout + t) layout.
  cols = np.repeat(np.arange(C), Lout)                       # channel id of each column
  P = (cols[:, None] == np.arange(C)[None, :]).astype(np.float32)   # (F, C)
  P = np.pad(P, ((0, Fp - F), (0, 0)))                               # (Fp, C)
  Pt = P.T                                                           # (C, Fp)

  def padw(a, rows, ncols, dtype):
    a = np.asarray(a, np.float32)
    a = np.pad(a, ((0, rows - a.shape[0]), (0, ncols - a.shape[1])))
    return jnp.asarray(a, dtype)

  return {
      "M": jnp.asarray(M, weight_dtype),
      "P": jnp.asarray(P, jnp.float32),
      "Pt": jnp.asarray(Pt, jnp.float32),
      "gamma": jnp.asarray(params["bn_gamma"], jnp.float32).reshape(1, C),
      "beta": jnp.asarray(params["bn_beta"], jnp.float32).reshape(1, C),
      "w1": padw(np.asarray(w1).T, Fp, H1p, weight_dtype),
      "b1": padw(np.asarray(b1).reshape(1, H1), 1, H1p, jnp.float32),
      "w2": padw(np.asarray(w2).T, H1p, H2p, weight_dtype),
      "b2": padw(np.asarray(b2).reshape(1, H2), 1, H2p, jnp.float32),
      "w3": padw(np.asarray(w3).T, H2p, OUTp, weight_dtype),
      "b3": padw(np.asarray(b3).reshape(1, OUT), 1, OUTp, jnp.float32),
      "Lout": Lout,
  }


# ---------------------------------------------------------------------------
# Forward wrapper (jit-friendly; n_out / return_bn_stats are static).
# ---------------------------------------------------------------------------
def cnn_forward(x, prep, *, n_out, return_bn_stats=False):
  M, P, Pt = prep["M"], prep["P"], prep["Pt"]
  gamma, beta = prep["gamma"], prep["beta"]
  w1, b1 = prep["w1"], prep["b1"]
  w2, b2 = prep["w2"], prep["b2"]
  w3, b3 = prep["w3"], prep["b3"]

  B, L = x.shape
  Lm, Fp = M.shape
  assert L == Lm, "input length does not match prepared conv matrix"
  C = gamma.shape[1]
  H1p, H2p, OUTp = w1.shape[1], w2.shape[1], w3.shape[1]

  # Pad batch to a multiple of 8 sublanes with ZERO rows; the one-pass BN stats
  # rely on the padded conv rows being exactly zero (do not change the pad value).
  Bp = _round_up(max(B, 1), 8)
  xk = x.astype(jnp.float32)
  if Bp != B:
    xk = jnp.pad(xk, ((0, Bp - B), (0, 0)))

  # Real element count per channel as SMEM scalars (no batch-size constants
  # baked into the Mosaic kernel).  n==1 guard: torch's unbiased var would NaN.
  n = jnp.asarray(B * prep["Lout"], jnp.float32)
  inv_n = 1.0 / n
  inv_nm1 = 1.0 / jnp.maximum(n - 1.0, 1.0)
  scal = jnp.stack([inv_n, inv_nm1]).astype(jnp.float32)

  out_p, stats = pl.pallas_call(
      _cnn_fused_kernel,
      grid=(1,),
      in_specs=[pl.BlockSpec(memory_space=pltpu.MemorySpace.SMEM),
                _full_spec((Bp, L)), _full_spec((L, Fp)),
                _full_spec((Fp, C)), _full_spec((C, Fp)),
                _full_spec((1, C)), _full_spec((1, C)),
                _full_spec((Fp, H1p)), _full_spec((1, H1p)),
                _full_spec((H1p, H2p)), _full_spec((1, H2p)),
                _full_spec((H2p, OUTp)), _full_spec((1, OUTp))],
      out_specs=(_full_spec((Bp, OUTp)),
                 _full_spec((STATS_ROWS, STATS_LANES))),
      out_shape=(jax.ShapeDtypeStruct((Bp, OUTp), jnp.float32),
                 jax.ShapeDtypeStruct((STATS_ROWS, STATS_LANES), jnp.float32)),
      compiler_params=pltpu.CompilerParams(dimension_semantics=("arbitrary",)),
  )(scal, xk, M, P, Pt, gamma, beta, w1, b1, w2, b2, w3, b3)

  out = out_p[:B, :n_out]
  if return_bn_stats:
    return out, [(stats[0, :C], stats[1, :C])]
  return out


# ---------------------------------------------------------------------------
# Deterministic parameter init (same shapes as the PyTorch module __init__
# with layout = [channels, 100, 100, 2]).
# ---------------------------------------------------------------------------
def init_params(key, input_size, channels=16, kernel_size=3):
  size = (input_size - (kernel_size - 1)) * channels
  ks = jax.random.split(key, 7)
  return {
      "conv_w": jax.random.normal(ks[0], (channels, 1, kernel_size), jnp.float32) * 0.3,
      "bn_gamma": jnp.ones((channels,), jnp.float32),   # BatchNorm1d default init
      "bn_beta": jnp.zeros((channels,), jnp.float32),
      "fc1_w": jax.random.normal(ks[1], (100, size), jnp.float32) / jnp.sqrt(size),
      "fc1_b": jax.random.normal(ks[2], (100,), jnp.float32) * 0.05,
      "fc2_w": jax.random.normal(ks[3], (100, 100), jnp.float32) * 0.1,
      "fc2_b": jax.random.normal(ks[4], (100,), jnp.float32) * 0.05,
      "fc3_w": jax.random.normal(ks[5], (2, 100), jnp.float32) * 0.1,
      "fc3_b": jax.random.normal(ks[6], (2,), jnp.float32) * 0.05,
  }


# ---------------------------------------------------------------------------
# Pure-JAX reference mirroring the PyTorch forward (for correctness check).
# ---------------------------------------------------------------------------
def reference_forward(x, p):
  C, _, K = p["conv_w"].shape
  B, L = x.shape
  Lout = L - K + 1
  wc = p["conv_w"].reshape(C, K)
  patches = jnp.stack([x[:, k:k + Lout] for k in range(K)], axis=-1)   # (B, Lout, K)
  conv = jnp.einsum("btk,ck->bct", patches, wc)                        # (B, C, Lout)
  mean = conv.mean(axis=(0, 2))
  var_unb = conv.var(axis=(0, 2), ddof=1)
  var_b = conv.var(axis=(0, 2))
  xn = (conv - mean[None, :, None]) / jnp.sqrt(var_b[None, :, None] + BN_EPS)
  xn = xn * p["bn_gamma"][None, :, None] + p["bn_beta"][None, :, None]
  h = jnp.maximum(xn, 0.0).reshape(B, C * Lout)                        # torch flatten
  a1 = jnp.maximum(h @ p["fc1_w"].T + p["fc1_b"], 0.0)
  a2 = jnp.maximum(a1 @ p["fc2_w"].T + p["fc2_b"], 0.0)
  out = a2 @ p["fc3_w"].T + p["fc3_b"]
  return out, mean, var_unb


if __name__ == "__main__":
  B, input_size, channels, kernel_size = 4, 16, 16, 3
  key = jax.random.PRNGKey(0)
  kx, kp = jax.random.split(key)
  x = jax.random.normal(kx, (B, input_size), jnp.float32)
  params = init_params(kp, input_size, channels, kernel_size)

  # Matmul weights are stored bf16 in the kernel (halves the weight-DMA prologue);
  # round the reference weights to the same bf16 grid so the comparison stays
  # apples-to-apples at tight tolerance (forward structure is unchanged).
  for k in ("conv_w", "fc1_w", "fc2_w", "fc3_w"):
    params[k] = params[k].astype(jnp.bfloat16).astype(jnp.float32)

  # One-time preprocessing (hoisted out of the forward path).
  prep = prepare_params(params, input_size)
  n_out = params["fc3_w"].shape[0]

  fwd = jax.jit(functools.partial(cnn_forward, n_out=n_out, return_bn_stats=True))
  out, bn_stats = fwd(x, prep)
  out = jax.block_until_ready(out)
  (mean, var), = bn_stats

  ref_out, ref_mean, ref_var = reference_forward(x, params)
  assert jnp.allclose(out, ref_out, atol=1e-4, rtol=1e-4), "output mismatch"
  assert jnp.allclose(mean, ref_mean, atol=2e-5, rtol=2e-5), "bn mean mismatch"
  assert jnp.allclose(var, ref_var, atol=2e-5, rtol=2e-5), "bn var mismatch"

  print("KERNEL_OK")
</pallas_src>

<mosaic_0001>
module attributes {stable_mosaic.version = 11 : i64} {
  func.func @_cnn_fused_kernel(%arg0: i32, %arg1: memref<2xf32, #tpu.memory_space<smem>>, %arg2: memref<8x16xf32, #tpu.memory_space<vmem>>, %arg3: memref<16x256xbf16, #tpu.memory_space<vmem>>, %arg4: memref<256x16xf32, #tpu.memory_space<vmem>>, %arg5: memref<16x256xf32, #tpu.memory_space<vmem>>, %arg6: memref<1x16xf32, #tpu.memory_space<vmem>>, %arg7: memref<1x16xf32, #tpu.memory_space<vmem>>, %arg8: memref<256x128xbf16, #tpu.memory_space<vmem>>, %arg9: memref<1x128xf32, #tpu.memory_space<vmem>>, %arg10: memref<128x128xbf16, #tpu.memory_space<vmem>>, %arg11: memref<1x128xf32, #tpu.memory_space<vmem>>, %arg12: memref<128x128xbf16, #tpu.memory_space<vmem>>, %arg13: memref<1x128xf32, #tpu.memory_space<vmem>>, %arg14: memref<8x128xf32, #tpu.memory_space<vmem>>, %arg15: memref<8x128xf32, #tpu.memory_space<vmem>>) attributes {dimension_semantics = [#tpu.dimension_semantics<arbitrary>], iteration_bounds = array<i64: 1>, scalar_prefetch = 0 : i64, scratch_operands = 0 : i64, tpu.core_type = #tpu.core_type<tc>, window_params = [{transform_indices = @transform_0, window_bounds = array<i64: 2>}, {pipeline_mode = #tpu.pipeline_mode<synchronous>, transform_indices = @transform_1, window_bounds = array<i64: 8, 16>}, {pipeline_mode = #tpu.pipeline_mode<synchronous>, transform_indices = @transform_2, window_bounds = array<i64: 16, 256>}, {pipeline_mode = #tpu.pipeline_mode<synchronous>, transform_indices = @transform_3, window_bounds = array<i64: 256, 16>}, {pipeline_mode = #tpu.pipeline_mode<synchronous>, transform_indices = @transform_4, window_bounds = array<i64: 16, 256>}, {pipeline_mode = #tpu.pipeline_mode<synchronous>, transform_indices = @transform_5, window_bounds = array<i64: 1, 16>}, {pipeline_mode = #tpu.pipeline_mode<synchronous>, transform_indices = @transform_6, window_bounds = array<i64: 1, 16>}, {pipeline_mode = #tpu.pipeline_mode<synchronous>, transform_indices = @transform_7, window_bounds = array<i64: 256, 128>}, {pipeline_mode = #tpu.pipeline_mode<synchronous>, transform_indices = @transform_8, window_bounds = array<i64: 1, 128>}, {pipeline_mode = #tpu.pipeline_mode<synchronous>, transform_indices = @transform_9, window_bounds = array<i64: 128, 128>}, {pipeline_mode = #tpu.pipeline_mode<synchronous>, transform_indices = @transform_10, window_bounds = array<i64: 1, 128>}, {pipeline_mode = #tpu.pipeline_mode<synchronous>, transform_indices = @transform_11, window_bounds = array<i64: 128, 128>}, {pipeline_mode = #tpu.pipeline_mode<synchronous>, transform_indices = @transform_12, window_bounds = array<i64: 1, 128>}, {pipeline_mode = #tpu.pipeline_mode<synchronous>, transform_indices = @transform_13, window_bounds = array<i64: 8, 128>}, {pipeline_mode = #tpu.pipeline_mode<synchronous>, transform_indices = @transform_14, window_bounds = array<i64: 8, 128>}]} {
    %c0 = arith.constant 0 : index
    %0 = memref.load %arg1[%c0] : memref<2xf32, #tpu.memory_space<smem>>
    %c1 = arith.constant 1 : index
    %1 = memref.load %arg1[%c1] : memref<2xf32, #tpu.memory_space<smem>>
    %c0_0 = arith.constant 0 : index
    %c0_1 = arith.constant 0 : index
    %2 = vector.load %arg2[%c0_0, %c0_1] : memref<8x16xf32, #tpu.memory_space<vmem>>, vector<8x16xf32>
    %c0_2 = arith.constant 0 : index
    %c0_3 = arith.constant 0 : index
    %3 = vector.load %arg3[%c0_2, %c0_3] : memref<16x256xbf16, #tpu.memory_space<vmem>>, vector<16x256xbf16>
    %4 = arith.extf %3 : vector<16x256xbf16> to vector<16x256xf32>
    %cst = arith.constant dense<0.000000e+00> : vector<8x256xf32>
    %5 = tpu.matmul %2, %4, %cst {dimension_numbers = #tpu.dot_dimension_numbers<[1], [0], [0], [1], [0, 0, 1, 1], [], []>} : vector<8x16xf32>, vector<16x256xf32>, vector<8x256xf32> -> vector<8x256xf32>
    %6 = arith.mulf %5, %5 : vector<8x256xf32>
    %7 = tpu.concatenate %5, %6 in 0 : vector<8x256xf32>, vector<8x256xf32> -> vector<16x256xf32>
    %c0_4 = arith.constant 0 : index
    %c0_5 = arith.constant 0 : index
    %8 = vector.load %arg4[%c0_4, %c0_5] : memref<256x16xf32, #tpu.memory_space<vmem>>, vector<256x16xf32>
    %cst_6 = arith.constant dense<0.000000e+00> : vector<16x16xf32>
    %9 = tpu.matmul %7, %8, %cst_6 {dimension_numbers = #tpu.dot_dimension_numbers<[1], [0], [0], [1], [0, 0, 1, 1], [], []>} : vector<16x256xf32>, vector<256x16xf32>, vector<16x16xf32> -> vector<16x16xf32>
    %10 = vector.extract_strided_slice %9 {offsets = [0, 0], sizes = [8, 16], strides = [1, 1]} : vector<16x16xf32> to vector<8x16xf32>
    %cst_7 = arith.constant dense<0.000000e+00> : vector<16xf32>
    %11 = vector.multi_reduction <add>, %10, %cst_7 [0] : vector<8x16xf32> to vector<16xf32>
    %12 = vector.shape_cast %11 : vector<16xf32> to vector<1x16xf32>
    %13 = vector.extract_strided_slice %9 {offsets = [8, 0], sizes = [8, 16], strides = [1, 1]} : vector<16x16xf32> to vector<8x16xf32>
    %cst_8 = arith.constant dense<0.000000e+00> : vector<16xf32>
    %14 = vector.multi_reduction <add>, %13, %cst_8 [0] : vector<8x16xf32> to vector<16xf32>
    %15 = vector.shape_cast %14 : vector<16xf32> to vector<1x16xf32>
    %16 = vector.broadcast %0 : f32 to vector<1x16xf32>
    %17 = arith.mulf %12, %16 : vector<1x16xf32>
    %18 = vector.broadcast %0 : f32 to vector<1x16xf32>
    %19 = arith.mulf %15, %18 : vector<1x16xf32>
    %20 = arith.mulf %17, %17 : vector<1x16xf32>
    %21 = arith.subf %19, %20 : vector<1x16xf32>
    %22 = arith.mulf %12, %17 : vector<1x16xf32>
    %23 = arith.subf %15, %22 : vector<1x16xf32>
    %24 = vector.broadcast %1 : f32 to vector<1x16xf32>
    %25 = arith.mulf %23, %24 : vector<1x16xf32>
    %c0_9 = arith.constant 0 : index
    %c0_10 = arith.constant 0 : index
    %26 = vector.load %arg6[%c0_9, %c0_10] : memref<1x16xf32, #tpu.memory_space<vmem>>, vector<1x16xf32>
    %cst_11 = arith.constant 9.99999974E-6 : f32
    %27 = vector.broadcast %cst_11 : f32 to vector<1x16xf32>
    %28 = arith.addf %21, %27 : vector<1x16xf32>
    %29 = math.rsqrt %28 : vector<1x16xf32>
    %30 = arith.mulf %26, %29 : vector<1x16xf32>
    %c0_12 = arith.constant 0 : index
    %c0_13 = arith.constant 0 : index
    %31 = vector.load %arg7[%c0_12, %c0_13] : memref<1x16xf32, #tpu.memory_space<vmem>>, vector<1x16xf32>
    %32 = arith.mulf %17, %30 : vector<1x16xf32>
    %33 = arith.subf %31, %32 : vector<1x16xf32>
    %34 = tpu.concatenate %30, %33 in 0 : vector<1x16xf32>, vector<1x16xf32> -> vector<2x16xf32>
    %c0_14 = arith.constant 0 : index
    %c0_15 = arith.constant 0 : index
    %35 = vector.load %arg5[%c0_14, %c0_15] : memref<16x256xf32, #tpu.memory_space<vmem>>, vector<16x256xf32>
    %cst_16 = arith.constant dense<0.000000e+00> : vector<2x256xf32>
    %36 = tpu.matmul %34, %35, %cst_16 {dimension_numbers = #tpu.dot_dimension_numbers<[1], [0], [0], [1], [0, 0, 1, 1], [], []>} : vector<2x16xf32>, vector<16x256xf32>, vector<2x256xf32> -> vector<2x256xf32>
    %37 = vector.extract_strided_slice %36 {offsets = [0, 0], sizes = [1, 256], strides = [1, 1]} : vector<2x256xf32> to vector<1x256xf32>
    %38 = vector.broadcast %37 : vector<1x256xf32> to vector<8x256xf32>
    %39 = arith.mulf %5, %38 : vector<8x256xf32>
    %40 = vector.extract_strided_slice %36 {offsets = [1, 0], sizes = [1, 256], strides = [1, 1]} : vector<2x256xf32> to vector<1x256xf32>
    %41 = vector.broadcast %40 : vector<1x256xf32> to vector<8x256xf32>
    %42 = arith.addf %39, %41 : vector<8x256xf32>
    %cst_17 = arith.constant 0.000000e+00 : f32
    %43 = vector.broadcast %cst_17 : f32 to vector<8x256xf32>
    %44 = arith.maximumf %42, %43 : vector<8x256xf32>
    %c0_18 = arith.constant 0 : index
    %c0_19 = arith.constant 0 : index
    %45 = vector.load %arg8[%c0_18, %c0_19] : memref<256x128xbf16, #tpu.memory_space<vmem>>, vector<256x128xbf16>
    %46 = arith.extf %45 : vector<256x128xbf16> to vector<256x128xf32>
    %cst_20 = arith.constant dense<0.000000e+00> : vector<8x128xf32>
    %47 = tpu.matmul %44, %46, %cst_20 {dimension_numbers = #tpu.dot_dimension_numbers<[1], [0], [0], [1], [0, 0, 1, 1], [], []>} : vector<8x256xf32>, vector<256x128xf32>, vector<8x128xf32> -> vector<8x128xf32>
    %c0_21 = arith.constant 0 : index
    %c0_22 = arith.constant 0 : index
    %48 = vector.load %arg9[%c0_21, %c0_22] : memref<1x128xf32, #tpu.memory_space<vmem>>, vector<1x128xf32>
    %49 = vector.broadcast %48 : vector<1x128xf32> to vector<8x128xf32>
    %50 = arith.addf %47, %49 : vector<8x128xf32>
    %cst_23 = arith.constant 0.000000e+00 : f32
    %51 = vector.broadcast %cst_23 : f32 to vector<8x128xf32>
    %52 = arith.maximumf %50, %51 : vector<8x128xf32>
    %c0_24 = arith.constant 0 : index
    %c0_25 = arith.constant 0 : index
    %53 = vector.load %arg10[%c0_24, %c0_25] : memref<128x128xbf16, #tpu.memory_space<vmem>>, vector<128x128xbf16>
    %54 = arith.extf %53 : vector<128x128xbf16> to vector<128x128xf32>
    %cst_26 = arith.constant dense<0.000000e+00> : vector<8x128xf32>
    %55 = tpu.matmul %52, %54, %cst_26 {dimension_numbers = #tpu.dot_dimension_numbers<[1], [0], [0], [1], [0, 0, 1, 1], [], []>} : vector<8x128xf32>, vector<128x128xf32>, vector<8x128xf32> -> vector<8x128xf32>
    %c0_27 = arith.constant 0 : index
    %c0_28 = arith.constant 0 : index
    %56 = vector.load %arg11[%c0_27, %c0_28] : memref<1x128xf32, #tpu.memory_space<vmem>>, vector<1x128xf32>
    %57 = vector.broadcast %56 : vector<1x128xf32> to vector<8x128xf32>
    %58 = arith.addf %55, %57 : vector<8x128xf32>
    %cst_29 = arith.constant 0.000000e+00 : f32
    %59 = vector.broadcast %cst_29 : f32 to vector<8x128xf32>
    %60 = arith.maximumf %58, %59 : vector<8x128xf32>
    %c0_30 = arith.constant 0 : index
    %c0_31 = arith.constant 0 : index
    %61 = vector.load %arg12[%c0_30, %c0_31] : memref<128x128xbf16, #tpu.memory_space<vmem>>, vector<128x128xbf16>
    %62 = arith.extf %61 : vector<128x128xbf16> to vector<128x128xf32>
    %cst_32 = arith.constant dense<0.000000e+00> : vector<8x128xf32>
    %63 = tpu.matmul %60, %62, %cst_32 {dimension_numbers = #tpu.dot_dimension_numbers<[1], [0], [0], [1], [0, 0, 1, 1], [], []>} : vector<8x128xf32>, vector<128x128xf32>, vector<8x128xf32> -> vector<8x128xf32>
    %c0_33 = arith.constant 0 : index
    %c0_34 = arith.constant 0 : index
    %64 = vector.load %arg13[%c0_33, %c0_34] : memref<1x128xf32, #tpu.memory_space<vmem>>, vector<1x128xf32>
    %65 = vector.broadcast %64 : vector<1x128xf32> to vector<8x128xf32>
    %66 = arith.addf %63, %65 : vector<8x128xf32>
    %c0_35 = arith.constant 0 : index
    %c0_36 = arith.constant 0 : index
    %67 = vector.load %arg14[%c0_35, %c0_36] : memref<8x128xf32, #tpu.memory_space<vmem>>, vector<8x128xf32>
    tpu.vector_store %arg14[%c0_35, %c0_36], %66 {strides = array<i32>} : memref<8x128xf32, #tpu.memory_space<vmem>>, vector<8x128xf32>,
    %cst_37 = arith.constant 0.000000e+00 : f32
    %68 = vector.broadcast %cst_37 : f32 to vector<6x16xf32>
    %69 = tpu.concatenate %17, %25, %68 in 0 : vector<1x16xf32>, vector<1x16xf32>, vector<6x16xf32> -> vector<8x16xf32>
    %cst_38 = arith.constant 0.000000e+00 : f32
    %70 = vector.broadcast %cst_38 : f32 to vector<8x112xf32>
    %71 = tpu.concatenate %69, %70 in 1 : vector<8x16xf32>, vector<8x112xf32> -> vector<8x128xf32>
    %c0_39 = arith.constant 0 : index
    %c0_40 = arith.constant 0 : index
    %72 = vector.load %arg15[%c0_39, %c0_40] : memref<8x128xf32, #tpu.memory_space<vmem>>, vector<8x128xf32>
    tpu.vector_store %arg15[%c0_39, %c0_40], %71 {strides = array<i32>} : memref<8x128xf32, #tpu.memory_space<vmem>>, vector<8x128xf32>,
    return
  }
  func.func @transform_0(%arg0: i32) -> i32 {
    %c0_i32 = arith.constant 0 : i32
    %c0_i32_0 = arith.constant 0 : i32
    return %c0_i32 : i32
  }
  func.func @transform_1(%arg0: i32) -> (i32, i32) {
    %c0_i32 = arith.constant 0 : i32
    %c0_i32_0 = arith.constant 0 : i32
    %c0_i32_1 = arith.constant 0 : i32
    return %c0_i32, %c0_i32_0 : i32, i32
  }
  func.func @transform_2(%arg0: i32) -> (i32, i32) {
    %c0_i32 = arith.constant 0 : i32
    %c0_i32_0 = arith.constant 0 : i32
    %c0_i32_1 = arith.constant 0 : i32
    return %c0_i32, %c0_i32_0 : i32, i32
  }
  func.func @transform_3(%arg0: i32) -> (i32, i32) {
    %c0_i32 = arith.constant 0 : i32
    %c0_i32_0 = arith.constant 0 : i32
    %c0_i32_1 = arith.constant 0 : i32
    return %c0_i32, %c0_i32_0 : i32, i32
  }
  func.func @transform_4(%arg0: i32) -> (i32, i32) {
    %c0_i32 = arith.constant 0 : i32
    %c0_i32_0 = arith.constant 0 : i32
    %c0_i32_1 = arith.constant 0 : i32
    return %c0_i32, %c0_i32_0 : i32, i32
  }
  func.func @transform_5(%arg0: i32) -> (i32, i32) {
    %c0_i32 = arith.constant 0 : i32
    %c0_i32_0 = arith.constant 0 : i32
    %c0_i32_1 = arith.constant 0 : i32
    return %c0_i32, %c0_i32_0 : i32, i32
  }
  func.func @transform_6(%arg0: i32) -> (i32, i32) {
    %c0_i32 = arith.constant 0 : i32
    %c0_i32_0 = arith.constant 0 : i32
    %c0_i32_1 = arith.constant 0 : i32
    return %c0_i32, %c0_i32_0 : i32, i32
  }
  func.func @transform_7(%arg0: i32) -> (i32, i32) {
    %c0_i32 = arith.constant 0 : i32
    %c0_i32_0 = arith.constant 0 : i32
    %c0_i32_1 = arith.constant 0 : i32
    return %c0_i32, %c0_i32_0 : i32, i32
  }
  func.func @transform_8(%arg0: i32) -> (i32, i32) {
    %c0_i32 = arith.constant 0 : i32
    %c0_i32_0 = arith.constant 0 : i32
    %c0_i32_1 = arith.constant 0 : i32
    return %c0_i32, %c0_i32_0 : i32, i32
  }
  func.func @transform_9(%arg0: i32) -> (i32, i32) {
    %c0_i32 = arith.constant 0 : i32
    %c0_i32_0 = arith.constant 0 : i32
    %c0_i32_1 = arith.constant 0 : i32
    return %c0_i32, %c0_i32_0 : i32, i32
  }
  func.func @transform_10(%arg0: i32) -> (i32, i32) {
    %c0_i32 = arith.constant 0 : i32
    %c0_i32_0 = arith.constant 0 : i32
    %c0_i32_1 = arith.constant 0 : i32
    return %c0_i32, %c0_i32_0 : i32, i32
  }
  func.func @transform_11(%arg0: i32) -> (i32, i32) {
    %c0_i32 = arith.constant 0 : i32
    %c0_i32_0 = arith.constant 0 : i32
    %c0_i32_1 = arith.constant 0 : i32
    return %c0_i32, %c0_i32_0 : i32, i32
  }
  func.func @transform_12(%arg0: i32) -> (i32, i32) {
    %c0_i32 = arith.constant 0 : i32
    %c0_i32_0 = arith.constant 0 : i32
    %c0_i32_1 = arith.constant 0 : i32
    return %c0_i32, %c0_i32_0 : i32, i32
  }
  func.func @transform_13(%arg0: i32) -> (i32, i32) {
    %c0_i32 = arith.constant 0 : i32
    %c0_i32_0 = arith.constant 0 : i32
    %c0_i32_1 = arith.constant 0 : i32
    return %c0_i32, %c0_i32_0 : i32, i32
  }
  func.func @transform_14(%arg0: i32) -> (i32, i32) {
    %c0_i32 = arith.constant 0 : i32
    %c0_i32_0 = arith.constant 0 : i32
    %c0_i32_1 = arith.constant 0 : i32
    return %c0_i32, %c0_i32_0 : i32, i32
  }
}

</mosaic_0001>

<llo_original>
// kernel: cnn_forward.1
$region0: #{cnn_forward.1}
  #allocation0 [shape = 'u32[]', space=smem, size = 0x4, offset = 0x4, fixed_abs, tag = 'smem constant byte address 0x4 - core index']
  #allocation1 [shape = 'u32[144,128]{1,0:T(1,128)}', space=vmem, size = 0x12000, scoped, tag = 'internal scratch']
  %s0 = inlined_call_operand.vmem [shape: f32[2], index: 0, kind: input, shape index: {}]
  %s1 = inlined_call_operand.vmem [shape: f32[8,16], index: 1, kind: input, shape index: {}]
  %s2 = inlined_call_operand.hbm [shape: bf16[16,256], index: 2, kind: input, shape index: {}]
  %s3 = inlined_call_operand.vmem [shape: f32[256,16], index: 3, kind: input, shape index: {}]
  %s4 = inlined_call_operand.vmem [shape: f32[16,256], index: 4, kind: input, shape index: {}]
  %s5 = inlined_call_operand.vmem [shape: f32[1,16], index: 5, kind: input, shape index: {}]
  %s6 = inlined_call_operand.vmem [shape: f32[1,16], index: 6, kind: input, shape index: {}]
  %s7 = inlined_call_operand.vmem [shape: bf16[256,128], index: 7, kind: input, shape index: {}]
  %s8 = inlined_call_operand.vmem [shape: f32[1,128], index: 8, kind: input, shape index: {}]
  %s9 = inlined_call_operand.vmem [shape: bf16[128,128], index: 9, kind: input, shape index: {}]
  %s10 = inlined_call_operand.vmem [shape: f32[1,128], index: 10, kind: input, shape index: {}]
  %s11 = inlined_call_operand.vmem [shape: bf16[128,128], index: 11, kind: input, shape index: {}]
  %s12 = inlined_call_operand.vmem [shape: f32[1,128], index: 12, kind: input, shape index: {}]
  %s13 = inlined_call_operand.vmem [shape: f32[8,128], index: 13, kind: output, shape index: {0}]
  %s14 = inlined_call_operand.vmem [shape: f32[8,128], index: 14, kind: output, shape index: {1}]
  %15 = xla_tuple %s13, %s14
  %s16 = sld [smem:[#allocation0]]
  $region78: #{cnn_forward.1} parent=0
    _
  %s18 = ssub.s32 1, %s16
  %s19 = scalar_select 0, %s18, %s16
  $region1: #{cnn_forward.1} parent=0
    #allocation2 [shape = 'u8[512]{0}', space=smem, size = 0x200, scoped, tag = 'input window, operand 0, single buffered']
    #allocation3 [shape = 's32[1]{0}', space=sflag, size = 0x4, scoped, tag = 'scoped memory for cnn_forward.1']
    #allocation4 [shape = 's32[1]{0}', space=sflag, size = 0x4, scoped, tag = 'scoped memory for cnn_forward.1']
    #allocation5 [shape = 'u8[8192]{0}', space=vmem, size = 0x2000, scoped, tag = 'input window, operand 2, single buffered']
    %20 = vsyncpa [#allocation4], 0
    %21 = vsyncpa [#allocation3], 0
    // Predicated region
    $region2: #{cnn_forward.1} parent=1 // pred_check
      _
    $region3: #{cnn_forward.1} parent=1 // pred_check_branch
      %23 = sbr.rel (0) target = $region5
    $region4: #{cnn_forward.1} parent=1 // pred_region
      %s25 = ssub.s32 16, 16
      %26 = vsyncadd [#allocation4], %s25
      %s28 = sshll.u32 %s0, 4
      %s29 = int_to_ptr.vmem [resolvable:$true] %s28
      %31 = dma.vmem_to_smem %s29, 16, [#allocation2], [#allocation4]
    $region5: #{cnn_forward.1} parent=1 // pred_fallthru
      _
    // Predicated region
    $region6: #{cnn_forward.1} parent=1 // pred_check
      _
    $region7: #{cnn_forward.1} parent=1 // pred_check_branch
      %33 = sbr.rel (0) target = $region9
    $region8: #{cnn_forward.1} parent=1 // pred_region
      _
    $region9: #{cnn_forward.1} parent=1 // pred_fallthru
      _
    // Predicated region
    $region10: #{cnn_forward.1} parent=1 // pred_check
      _
    $region11: #{cnn_forward.1} parent=1 // pred_check_branch
      %35 = sbr.rel (0) target = $region13
    $region12: #{cnn_forward.1} parent=1 // pred_region
      %s37 = ssub.s32 256, 256
      %38 = vsyncadd [#allocation3], %s37
      %s39 = sshll.u32 [#allocation5], 4
      %s40 = int_to_ptr.vmem [resolvable:$true] %s39
      %45 = dma.hbm_to_vmem [thread:$0]  %s2, 256, %s40, [#allocation3], 128, 128, 8
    $region13: #{cnn_forward.1} parent=1 // pred_fallthru
      _
    // Predicated region
    $region14: #{cnn_forward.1} parent=1 // pred_check
      _
    $region15: #{cnn_forward.1} parent=1 // pred_check_branch
      %47 = sbr.rel (0) target = $region17
    $region16: #{cnn_forward.1} parent=1 // pred_region
      _
    $region17: #{cnn_forward.1} parent=1 // pred_fallthru
      _
    // Predicated region
    $region18: #{cnn_forward.1} parent=1 // pred_check
      _
    $region19: #{cnn_forward.1} parent=1 // pred_check_branch
      %49 = sbr.rel (0) target = $region21
    $region20: #{cnn_forward.1} parent=1 // pred_region
      _
    $region21: #{cnn_forward.1} parent=1 // pred_fallthru
      _
    // Predicated region
    $region22: #{cnn_forward.1} parent=1 // pred_check
      _
    $region23: #{cnn_forward.1} parent=1 // pred_check_branch
      %51 = sbr.rel (0) target = $region25
    $region24: #{cnn_forward.1} parent=1 // pred_region
      _
    $region25: #{cnn_forward.1} parent=1 // pred_fallthru
      _
    // Predicated region
    $region26: #{cnn_forward.1} parent=1 // pred_check
      _
    $region27: #{cnn_forward.1} parent=1 // pred_check_branch
      %53 = sbr.rel (0) target = $region29
    $region28: #{cnn_forward.1} parent=1 // pred_region
      _
    $region29: #{cnn_forward.1} parent=1 // pred_fallthru
      _
    // Predicated region
    $region30: #{cnn_forward.1} parent=1 // pred_check
      _
    $region31: #{cnn_forward.1} parent=1 // pred_check_branch
      %55 = sbr.rel (0) target = $region33
    $region32: #{cnn_forward.1} parent=1 // pred_region
      _
    $region33: #{cnn_forward.1} parent=1 // pred_fallthru
      _
    // Predicated region
    $region34: #{cnn_forward.1} parent=1 // pred_check
      _
    $region35: #{cnn_forward.1} parent=1 // pred_check_branch
      %57 = sbr.rel (0) target = $region37
    $region36: #{cnn_forward.1} parent=1 // pred_region
      _
    $region37: #{cnn_forward.1} parent=1 // pred_fallthru
      _
    // Predicated region
    $region38: #{cnn_forward.1} parent=1 // pred_check
      _
    $region39: #{cnn_forward.1} parent=1 // pred_check_branch
      %59 = sbr.rel (0) target = $region41
    $region40: #{cnn_forward.1} parent=1 // pred_region
      _
    $region41: #{cnn_forward.1} parent=1 // pred_fallthru
      _
    // Predicated region
    $region42: #{cnn_forward.1} parent=1 // pred_check
      _
    $region43: #{cnn_forward.1} parent=1 // pred_check_branch
      %61 = sbr.rel (0) target = $region45
    $region44: #{cnn_forward.1} parent=1 // pred_region
      _
    $region45: #{cnn_forward.1} parent=1 // pred_fallthru
      _
    // Predicated region
    $region46: #{cnn_forward.1} parent=1 // pred_check
      _
    $region47: #{cnn_forward.1} parent=1 // pred_check_branch
      %63 = sbr.rel (0) target = $region49
    $region48: #{cnn_forward.1} parent=1 // pred_region
      _
    $region49: #{cnn_forward.1} parent=1 // pred_fallthru
      _
    // Predicated region
    $region50: #{cnn_forward.1} parent=1 // pred_check
      _
    $region51: #{cnn_forward.1} parent=1 // pred_check_branch
      %65 = sbr.rel (0) target = $region53
    $region52: #{cnn_forward.1} parent=1 // pred_region
      _
    $region53: #{cnn_forward.1} parent=1 // pred_fallthru
      _
    // Predicated region
    $region54: #{cnn_forward.1} parent=1 // pred_check
      _
    $region55: #{cnn_forward.1} parent=1 // pred_check_branch
      %67 = sbr.rel (0) target = $region57
    $region56: #{cnn_forward.1} parent=1 // pred_region
      %68 = dma.done [#allocation4], 16
    $region57: #{cnn_forward.1} parent=1 // pred_fallthru
      _
    // Predicated region
    $region58: #{cnn_forward.1} parent=1 // pred_check
      _
    $region59: #{cnn_forward.1} parent=1 // pred_check_branch
      %70 = sbr.rel (0) target = $region61
    $region60: #{cnn_forward.1} parent=1 // pred_region
      %71 = dma.done [#allocation3], 256
    $region61: #{cnn_forward.1} parent=1 // pred_fallthru
      _
    %72 = sfence
    %s73 = sld [smem:[#allocation2]]
    %s74 = sld [smem:[#allocation2 + $0x1]]
    %v75 = vld [vmem:[%s1] sm:$0xff]
    %v76 = vld [vmem:[#allocation5] sm:$0xff]
    %v77 = vld [vmem:[#allocation5 + $0x8] sm:$0xff]
    %v78 = vunpack.c.l.bf16 %v76
    %v79 = vunpack.c.h.bf16 %v76
    %v80 = vunpack.c.l.bf16 %v77
    %v81 = vunpack.c.h.bf16 %v77
    %vm82 = vcmask 130048
    %v84 = vsel %vm82, %v75, 0
    %86 = vmatprep.subr.mxu0 0.0
    %87 = vmatpush1.msra.mxu0 0.0
    %88 = vmatprep.subr.mxu0 0.0
    %89 = vmatpush1.msra.mxu0 0.0
    %90 = vmatprep.subr.mxu0 0.0
    %91 = vmatpush1.msra.mxu0 0.0
    %92 = vmatprep.subr.mxu0 0.0
    %93 = vmatpush1.msra.mxu0 0.0
    %94 = vmatprep.subr.mxu0 0.0
    %95 = vmatpush1.msra.mxu0 0.0
    %96 = vmatprep.subr.mxu0 0.0
    %97 = vmatpush1.msra.mxu0 0.0
    %98 = vmatprep.subr.mxu0 0.0
    %99 = vmatpush1.msra.mxu0 0.0
    %100 = vmatprep.subr.mxu0 0.0
    %101 = vmatpush1.msra.mxu0 0.0
    %102 = vmatprep.subr.mxu0 0.0
    %103 = vmatpush1.msra.mxu0 0.0
    %104 = vmatprep.subr.mxu0 0.0
    %105 = vmatpush1.msra.mxu0 0.0
    %106 = vmatprep.subr.mxu0 0.0
    %107 = vmatpush1.msra.mxu0 0.0
    %108 = vmatprep.subr.mxu0 0.0
    %109 = vmatpush1.msra.mxu0 0.0
    %110 = vmatprep.subr.mxu0 0.0
    %111 = vmatpush1.msra.mxu0 0.0
    %112 = vmatprep.subr.mxu0 0.0
    %113 = vmatpush1.msra.mxu0 0.0
    %114 = vmatprep.subr.mxu0 %v81
    %115 = vmatpush1.msra.mxu0 %v80
    %116 = vmatprep.subr.mxu0 %v79
    %117 = vmatpush1.msra.mxu0 %v78
    %118 = vmatprep.subr.mxu0 0.0
    %119 = vmatpush2.msra.mxu0 0.0
    %120 = vmatprep.subr.mxu0 0.0
    %121 = vmatpush2.msra.mxu0 0.0
    %122 = vmatprep.subr.mxu0 0.0
    %123 = vmatpush2.msra.mxu0 0.0
    %124 = vmatprep.subr.mxu0 0.0
    %125 = vmatpush2.msra.mxu0 0.0
    %126 = vmatprep.subr.mxu0 0.0
    %127 = vmatpush2.msra.mxu0 0.0
    %128 = vmatprep.subr.mxu0 0.0
    %129 = vmatpush2.msra.mxu0 0.0
    %130 = vmatprep.subr.mxu0 0.0
    %131 = vmatpush2.msra.mxu0 0.0
    %132 = vmatprep.subr.mxu0 0.0
    %133 = vmatpush2.msra.mxu0 0.0
    %134 = vmatprep.subr.mxu0 0.0
    %135 = vmatpush2.msra.mxu0 0.0
    %136 = vmatprep.subr.mxu0 0.0
    %137 = vmatpush2.msra.mxu0 0.0
    %138 = vmatprep.subr.mxu0 0.0
    %139 = vmatpush2.msra.mxu0 0.0
    %140 = vmatprep.subr.mxu0 0.0
    %141 = vmatpush2.msra.mxu0 0.0
    %142 = vmatprep.subr.mxu0 0.0
    %143 = vmatpush2.msra.mxu0 0.0
    %144 = vmatprep.subr.mxu0 0.0
    %145 = vmatpush2.msra.mxu0 0.0
    %146 = vmatprep.subr.mxu0 0.0
    %147 = vmatpush2.msra.mxu0 0.0
    %148 = vmatprep.subr.mxu0 0.0
    %149 = vmatpush2.msra.mxu0 0.0
    %150 = vmatprep.mubr.f32.mxu0 0.0
    %151 = vmatmul.mubr.f32.gmra.mxu0 %v84
    %v152 = vpop.f32.mrf.mxu0
    %v153 = vadd.f32 0.0, %v152
    %v154 = vpop.f32.mrf.mxu0
    %v155 = vadd.f32 0.0, %v154
    %156 = vdwg.mxu0
    %v157 = vmul.f32 %v153, %v153
    %v158 = vmul.f32 %v155, %v155
    %v159 = vld [vmem:[%s3] sm:$0xff]
    %v160 = vld [vmem:[%s3 + $0x8] sm:$0xff]
    %v161 = vld [vmem:[%s3 + $0x10] sm:$0xff]
    %v162 = vld [vmem:[%s3 + $0x18] sm:$0xff]
    %v163 = vld [vmem:[%s3 + $0x20] sm:$0xff]
    %v164 = vld [vmem:[%s3 + $0x28] sm:$0xff]
    %v165 = vld [vmem:[%s3 + $0x30] sm:$0xff]
    %v166 = vld [vmem:[%s3 + $0x38] sm:$0xff]
    %v167 = vld [vmem:[%s3 + $0x40] sm:$0xff]
    %v168 = vld [vmem:[%s3 + $0x48] sm:$0xff]
    %v169 = vld [vmem:[%s3 + $0x50] sm:$0xff]
    %v170 = vld [vmem:[%s3 + $0x58] sm:$0xff]
    %v171 = vld [vmem:[%s3 + $0x60] sm:$0xff]
    %v172 = vld [vmem:[%s3 + $0x68] sm:$0xff]
    %v173 = vld [vmem:[%s3 + $0x70] sm:$0xff]
    %v174 = vld [vmem:[%s3 + $0x78] sm:$0xff]
    %v175 = vld [vmem:[%s3 + $0x80] sm:$0xff]
    %v176 = vld [vmem:[%s3 + $0x88] sm:$0xff]
    %v177 = vld [vmem:[%s3 + $0x90] sm:$0xff]
    %v178 = vld [vmem:[%s3 + $0x98] sm:$0xff]
    %v179 = vld [vmem:[%s3 + $0xa0] sm:$0xff]
    %v180 = vld [vmem:[%s3 + $0xa8] sm:$0xff]
    %v181 = vld [vmem:[%s3 + $0xb0] sm:$0xff]
    %v182 = vld [vmem:[%s3 + $0xb8] sm:$0xff]
    %v183 = vld [vmem:[%s3 + $0xc0] sm:$0xff]
    %v184 = vld [vmem:[%s3 + $0xc8] sm:$0xff]
    %v185 = vld [vmem:[%s3 + $0xd0] sm:$0xff]
    %v186 = vld [vmem:[%s3 + $0xd8] sm:$0xff]
    %v187 = vld [vmem:[%s3 + $0xe0] sm:$0xff]
    %v188 = vld [vmem:[%s3 + $0xe8] sm:$0xff]
    %v189 = vld [vmem:[%s3 + $0xf0] sm:$0xff]
    %v190 = vld [vmem:[%s3 + $0xf8] sm:$0xff]
    %191 = vmatprep.subr.mxu0 0.0
    %192 = vmatpush1.msra.mxu0 %v174
    %193 = vmatprep.subr.mxu0 0.0
    %194 = vmatpush1.msra.mxu0 %v173
    %195 = vmatprep.subr.mxu0 0.0
    %196 = vmatpush1.msra.mxu0 %v172
    %197 = vmatprep.subr.mxu0 0.0
    %198 = vmatpush1.msra.mxu0 %v171
    %199 = vmatprep.subr.mxu0 0.0
    %200 = vmatpush1.msra.mxu0 %v170
    %201 = vmatprep.subr.mxu0 0.0
    %202 = vmatpush1.msra.mxu0 %v169
    %203 = vmatprep.subr.mxu0 0.0
    %204 = vmatpush1.msra.mxu0 %v168
    %205 = vmatprep.subr.mxu0 0.0
    %206 = vmatpush1.msra.mxu0 %v167
    %207 = vmatprep.subr.mxu0 0.0
    %208 = vmatpush1.msra.mxu0 %v166
    %209 = vmatprep.subr.mxu0 0.0
    %210 = vmatpush1.msra.mxu0 %v165
    %211 = vmatprep.subr.mxu0 0.0
    %212 = vmatpush1.msra.mxu0 %v164
    %213 = vmatprep.subr.mxu0 0.0
    %214 = vmatpush1.msra.mxu0 %v163
    %215 = vmatprep.subr.mxu0 0.0
    %216 = vmatpush1.msra.mxu0 %v162
    %217 = vmatprep.subr.mxu0 0.0
    %218 = vmatpush1.msra.mxu0 %v161
    %219 = vmatprep.subr.mxu0 0.0
    %220 = vmatpush1.msra.mxu0 %v160
    %221 = vmatprep.subr.mxu0 0.0
    %222 = vmatpush1.msra.mxu0 %v159
    %223 = vmatprep.subr.mxu0 0.0
    %224 = vmatpush2.msra.mxu0 %v190
    %225 = vmatprep.subr.mxu0 0.0
    %226 = vmatpush2.msra.mxu0 %v189
    %227 = vmatprep.subr.mxu0 0.0
    %228 = vmatpush2.msra.mxu0 %v188
    %229 = vmatprep.subr.mxu0 0.0
    %230 = vmatpush2.msra.mxu0 %v187
    %231 = vmatprep.subr.mxu0 0.0
    %232 = vmatpush2.msra.mxu0 %v186
    %233 = vmatprep.subr.mxu0 0.0
    %234 = vmatpush2.msra.mxu0 %v185
    %235 = vmatprep.subr.mxu0 0.0
    %236 = vmatpush2.msra.mxu0 %v184
    %237 = vmatprep.subr.mxu0 0.0
    %238 = vmatpush2.msra.mxu0 %v183
    %239 = vmatprep.subr.mxu0 0.0
    %240 = vmatpush2.msra.mxu0 %v182
    %241 = vmatprep.subr.mxu0 0.0
    %242 = vmatpush2.msra.mxu0 %v181
    %243 = vmatprep.subr.mxu0 0.0
    %244 = vmatpush2.msra.mxu0 %v180
    %245 = vmatprep.subr.mxu0 0.0
    %246 = vmatpush2.msra.mxu0 %v179
    %247 = vmatprep.subr.mxu0 0.0
    %248 = vmatpush2.msra.mxu0 %v178
    %249 = vmatprep.subr.mxu0 0.0
    %250 = vmatpush2.msra.mxu0 %v177
    %251 = vmatprep.subr.mxu0 0.0
    %252 = vmatpush2.msra.mxu0 %v176
    %253 = vmatprep.subr.mxu0 0.0
    %254 = vmatpush2.msra.mxu0 %v175
    %255 = vmatprep.mubr.f32.mxu0 %v155
    %256 = vmatmul.mubr.f32.gmra.mxu0 %v153
    %v257 = vpop.f32.mrf.mxu0
    %v258 = vadd.f32 0.0, %v257
    %v259 = vpop.f32.mrf.mxu0
    %260 = vmatprep.mubr.f32.mxu0 %v158
    %261 = vmatmul.mubr.f32.gmra.mxu0 %v157
    %v262 = vpop.f32.mrf.mxu0
    %v263 = vadd.f32 0.0, %v262
    %v264 = vpop.f32.mrf.mxu0
    %265 = vdwg.mxu0
    %v266 = vsel %vm82, %v258, 0.0
    %v267 = vrot.slane %v266, 4
    %v268 = vadd.f32 %v266, %v267
    %v269 = vrot.slane %v268, 2
    %v270 = vadd.f32 %v268, %v269
    %v271 = vrot.slane %v270, 1
    %v272 = vadd.f32 %v270, %v271
    %v273 = vsel %vm82, %v263, 0.0
    %v274 = vrot.slane %v273, 4
    %v275 = vadd.f32 %v273, %v274
    %v276 = vrot.slane %v275, 2
    %v277 = vadd.f32 %v275, %v276
    %v278 = vrot.slane %v277, 1
    %v279 = vadd.f32 %v277, %v278
    %v280 = vstv %s73
    %v281 = vmul.f32 %v272, %v280
    %v282 = vmul.f32 %v279, %v280
    %v283 = vmul.f32 %v281, %v281
    %v284 = vsub.f32 %v282, %v283
    %v285 = vmul.f32 %v272, %v281
    %v286 = vsub.f32 %v279, %v285
    %v287 = vstv %s74
    %v288 = vmul.f32 %v286, %v287
    %v289 = vld [vmem:[%s5] sm:$0x1]
    %v290 = vadd.f32 %v284, 1e-05
    %v291 = vrsqrt.pop %v290
    %v292 = vmul.f32 %v289, %v291
    %v293 = vld [vmem:[%s6] sm:$0x1]
    %v294 = vmul.f32 %v281, %v292
    %v295 = vsub.f32 %v293, %v294
    %v297 = vlaneseq
    %v298 = vshrl.u32 %v297, 7
    %v299 = vsub.s32 0, %v298
    %v300 = vrot.slane %v295, %v299
    %vm302 = vcmask 1040384
    %v303 = vsel %vm302, %v292, %v300
    %v304 = vld [vmem:[%s4] sm:$0xff]
    %v305 = vld [vmem:[%s4 + $0x8] sm:$0xff]
    %v306 = vld [vmem:[%s4 + $0x10] sm:$0xff]
    %v307 = vld [vmem:[%s4 + $0x18] sm:$0xff]
    %v309 = vsel %vm82, %v303, 0
    %311 = vmatprep.subr.mxu0 0.0
    %312 = vmatpush1.msra.mxu0 0.0
    %313 = vmatprep.subr.mxu0 0.0
    %314 = vmatpush1.msra.mxu0 0.0
    %315 = vmatprep.subr.mxu0 0.0
    %316 = vmatpush1.msra.mxu0 0.0
    %317 = vmatprep.subr.mxu0 0.0
    %318 = vmatpush1.msra.mxu0 0.0
    %319 = vmatprep.subr.mxu0 0.0
    %320 = vmatpush1.msra.mxu0 0.0
    %321 = vmatprep.subr.mxu0 0.0
    %322 = vmatpush1.msra.mxu0 0.0
    %323 = vmatprep.subr.mxu0 0.0
    %324 = vmatpush1.msra.mxu0 0.0
    %325 = vmatprep.subr.mxu0 0.0
    %326 = vmatpush1.msra.mxu0 0.0
    %327 = vmatprep.subr.mxu0 0.0
    %328 = vmatpush1.msra.mxu0 0.0
    %329 = vmatprep.subr.mxu0 0.0
    %330 = vmatpush1.msra.mxu0 0.0
    %331 = vmatprep.subr.mxu0 0.0
    %332 = vmatpush1.msra.mxu0 0.0
    %333 = vmatprep.subr.mxu0 0.0
    %334 = vmatpush1.msra.mxu0 0.0
    %335 = vmatprep.subr.mxu0 0.0
    %336 = vmatpush1.msra.mxu0 0.0
    %337 = vmatprep.subr.mxu0 0.0
    %338 = vmatpush1.msra.mxu0 0.0
    %339 = vmatprep.subr.mxu0 %v307
    %340 = vmatpush1.msra.mxu0 %v306
    %341 = vmatprep.subr.mxu0 %v305
    %342 = vmatpush1.msra.mxu0 %v304
    %343 = vmatprep.subr.mxu0 0.0
    %344 = vmatpush2.msra.mxu0 0.0
    %345 = vmatprep.subr.mxu0 0.0
    %346 = vmatpush2.msra.mxu0 0.0
    %347 = vmatprep.subr.mxu0 0.0
    %348 = vmatpush2.msra.mxu0 0.0
    %349 = vmatprep.subr.mxu0 0.0
    %350 = vmatpush2.msra.mxu0 0.0
    %351 = vmatprep.subr.mxu0 0.0
    %352 = vmatpush2.msra.mxu0 0.0
    %353 = vmatprep.subr.mxu0 0.0
    %354 = vmatpush2.msra.mxu0 0.0
    %355 = vmatprep.subr.mxu0 0.0
    %356 = vmatpush2.msra.mxu0 0.0
    %357 = vmatprep.subr.mxu0 0.0
    %358 = vmatpush2.msra.mxu0 0.0
    %359 = vmatprep.subr.mxu0 0.0
    %360 = vmatpush2.msra.mxu0 0.0
    %361 = vmatprep.subr.mxu0 0.0
    %362 = vmatpush2.msra.mxu0 0.0
    %363 = vmatprep.subr.mxu0 0.0
    %364 = vmatpush2.msra.mxu0 0.0
    %365 = vmatprep.subr.mxu0 0.0
    %366 = vmatpush2.msra.mxu0 0.0
    %367 = vmatprep.subr.mxu0 0.0
    %368 = vmatpush2.msra.mxu0 0.0
    %369 = vmatprep.subr.mxu0 0.0
    %370 = vmatpush2.msra.mxu0 0.0
    %371 = vmatprep.subr.mxu0 0.0
    %372 = vmatpush2.msra.mxu0 0.0
    %373 = vmatprep.subr.mxu0 0.0
    %374 = vmatpush2.msra.mxu0 0.0
    %375 = vmatprep.mubr.f32.mxu0 0.0
    %376 = vmatmul.mubr.f32.gmra.mxu0 %v309
    %v377 = vpop.f32.mrf.mxu0
    %v378 = vadd.f32 0.0, %v377
    %v379 = vpop.f32.mrf.mxu0
    %v380 = vadd.f32 0.0, %v379
    %381 = vdwg.mxu0
    %v382 = vlaneseq
    %v383 = vshrl.u32 %v382, 7
    %v384 = vsub.s32 0, %v383
    %v385 = vrot.slane %v378, %v384
    %v386 = vlaneseq
    %v387 = vshrl.u32 %v386, 7
    %v388 = vsub.s32 0, %v387
    %v389 = vrot.slane %v380, %v388
    %v390 = vmul.f32 %v153, %v385
    %v391 = vmul.f32 %v155, %v389
    %v392 = vlaneseq
    %v393 = vshrl.u32 %v392, 7
    %v394 = vsub.s32 1, %v393
    %v395 = vrot.slane %v378, %v394
    %v396 = vlaneseq
    %v397 = vshrl.u32 %v396, 7
    %v398 = vsub.s32 1, %v397
    %v399 = vrot.slane %v380, %v398
    %v400 = vadd.f32 %v390, %v395
    %v401 = vadd.f32 %v391, %v399
    %v402 = vmax.f32 %v400, 0.0
    %v403 = vmax.f32 %v401, 0.0
    %v404 = vld [vmem:[%s7] sm:$0xf]
    %v405 = vld [vmem:[%s7 + $0x4] sm:$0xf]
    %v406 = vld [vmem:[%s7 + $0x8] sm:$0xf]
    %v407 = vld [vmem:[%s7 + $0xc] sm:$0xf]
    %v408 = vld [vmem:[%s7 + $0x10] sm:$0xf]
    %v409 = vld [vmem:[%s7 + $0x14] sm:$0xf]
    %v410 = vld [vmem:[%s7 + $0x18] sm:$0xf]
    %v411 = vld [vmem:[%s7 + $0x1c] sm:$0xf]
    %v412 = vld [vmem:[%s7 + $0x20] sm:$0xf]
    %v413 = vld [vmem:[%s7 + $0x24] sm:$0xf]
    %v414 = vld [vmem:[%s7 + $0x28] sm:$0xf]
    %v415 = vld [vmem:[%s7 + $0x2c] sm:$0xf]
    %v416 = vld [vmem:[%s7 + $0x30] sm:$0xf]
    %v417 = vld [vmem:[%s7 + $0x34] sm:$0xf]
    %v418 = vld [vmem:[%s7 + $0x38] sm:$0xf]
    %v419 = vld [vmem:[%s7 + $0x3c] sm:$0xf]
    %v420 = vld [vmem:[%s7 + $0x40] sm:$0xf]
    %v421 = vld [vmem:[%s7 + $0x44] sm:$0xf]
    %v422 = vld [vmem:[%s7 + $0x48] sm:$0xf]
    %v423 = vld [vmem:[%s7 + $0x4c] sm:$0xf]
    %v424 = vld [vmem:[%s7 + $0x50] sm:$0xf]
    %v425 = vld [vmem:[%s7 + $0x54] sm:$0xf]
    %v426 = vld [vmem:[%s7 + $0x58] sm:$0xf]
    %v427 = vld [vmem:[%s7 + $0x5c] sm:$0xf]
    %v428 = vld [vmem:[%s7 + $0x60] sm:$0xf]
    %v429 = vld [vmem:[%s7 + $0x64] sm:$0xf]
    %v430 = vld [vmem:[%s7 + $0x68] sm:$0xf]
    %v431 = vld [vmem:[%s7 + $0x6c] sm:$0xf]
    %v432 = vld [vmem:[%s7 + $0x70] sm:$0xf]
    %v433 = vld [vmem:[%s7 + $0x74] sm:$0xf]
    %v434 = vld [vmem:[%s7 + $0x78] sm:$0xf]
    %v435 = vld [vmem:[%s7 + $0x7c] sm:$0xf]
    %v436 = vunpack.c.l.bf16 %v404
    %v437 = vunpack.c.l.bf16 %v405
    %v438 = vunpack.c.l.bf16 %v406
    %v439 = vunpack.c.l.bf16 %v407
    %v440 = vunpack.c.l.bf16 %v408
    %v441 = vunpack.c.l.bf16 %v409
    %v442 = vunpack.c.l.bf16 %v410
    %v443 = vunpack.c.l.bf16 %v411
    %v444 = vunpack.c.l.bf16 %v412
    %v445 = vunpack.c.l.bf16 %v413
    %v446 = vunpack.c.l.bf16 %v414
    %v447 = vunpack.c.l.bf16 %v415
    %v448 = vunpack.c.l.bf16 %v416
    %v449 = vunpack.c.l.bf16 %v417
    %v450 = vunpack.c.l.bf16 %v418
    %v451 = vunpack.c.l.bf16 %v419
    %v452 = vunpack.c.l.bf16 %v420
    %v453 = vunpack.c.l.bf16 %v421
    %v454 = vunpack.c.l.bf16 %v422
    %v455 = vunpack.c.l.bf16 %v423
    %v456 = vunpack.c.l.bf16 %v424
    %v457 = vunpack.c.l.bf16 %v425
    %v458 = vunpack.c.l.bf16 %v426
    %v459 = vunpack.c.l.bf16 %v427
    %v460 = vunpack.c.l.bf16 %v428
    %v461 = vunpack.c.l.bf16 %v429
    %v462 = vunpack.c.l.bf16 %v430
    %v463 = vunpack.c.l.bf16 %v431
    %v464 = vunpack.c.l.bf16 %v432
    %v465 = vunpack.c.l.bf16 %v433
    %v466 = vunpack.c.l.bf16 %v434
    %v467 = vunpack.c.l.bf16 %v435
    %v468 = vld [vmem:[%s8] sm:$0x1]
    %v470 = vlaneseq
    %v471 = vshrl.u32 %v470, 7
    %v472 = vsub.s32 0, %v471
    %v473 = vrot.slane %v468, %v472
    %475 = vmatprep.subr.mxu0 0.0
    %476 = vmatpush1.msra.mxu0 %v451
    %477 = vmatprep.subr.mxu0 0.0
    %478 = vmatpush1.msra.mxu0 %v450
    %479 = vmatprep.subr.mxu0 0.0
    %480 = vmatpush1.msra.mxu0 %v449
    %481 = vmatprep.subr.mxu0 0.0
    %482 = vmatpush1.msra.mxu0 %v448
    %483 = vmatprep.subr.mxu0 0.0
    %484 = vmatpush1.msra.mxu0 %v447
    %485 = vmatprep.subr.mxu0 0.0
    %486 = vmatpush1.msra.mxu0 %v446
    %487 = vmatprep.subr.mxu0 0.0
    %488 = vmatpush1.msra.mxu0 %v445
    %489 = vmatprep.subr.mxu0 0.0
    %490 = vmatpush1.msra.mxu0 %v444
    %491 = vmatprep.subr.mxu0 0.0
    %492 = vmatpush1.msra.mxu0 %v443
    %493 = vmatprep.subr.mxu0 0.0
    %494 = vmatpush1.msra.mxu0 %v442
    %495 = vmatprep.subr.mxu0 0.0
    %496 = vmatpush1.msra.mxu0 %v441
    %497 = vmatprep.subr.mxu0 0.0
    %498 = vmatpush1.msra.mxu0 %v440
    %499 = vmatprep.subr.mxu0 0.0
    %500 = vmatpush1.msra.mxu0 %v439
    %501 = vmatprep.subr.mxu0 0.0
    %502 = vmatpush1.msra.mxu0 %v438
    %503 = vmatprep.subr.mxu0 0.0
    %504 = vmatpush1.msra.mxu0 %v437
    %505 = vmatprep.subr.mxu0 0.0
    %506 = vmatpush1.msra.mxu0 %v436
    %507 = vmatprep.subr.mxu0 0.0
    %508 = vmatpush2.msra.mxu0 %v467
    %509 = vmatprep.subr.mxu0 0.0
    %510 = vmatpush2.msra.mxu0 %v466
    %511 = vmatprep.subr.mxu0 0.0
    %512 = vmatpush2.msra.mxu0 %v465
    %513 = vmatprep.subr.mxu0 0.0
    %514 = vmatpush2.msra.mxu0 %v464
    %515 = vmatprep.subr.mxu0 0.0
    %516 = vmatpush2.msra.mxu0 %v463
    %517 = vmatprep.subr.mxu0 0.0
    %518 = vmatpush2.msra.mxu0 %v462
    %519 = vmatprep.subr.mxu0 0.0
    %520 = vmatpush2.msra.mxu0 %v461
    %521 = vmatprep.subr.mxu0 0.0
    %522 = vmatpush2.msra.mxu0 %v460
    %523 = vmatprep.subr.mxu0 0.0
    %524 = vmatpush2.msra.mxu0 %v459
    %525 = vmatprep.subr.mxu0 0.0
    %526 = vmatpush2.msra.mxu0 %v458
    %527 = vmatprep.subr.mxu0 0.0
    %528 = vmatpush2.msra.mxu0 %v457
    %529 = vmatprep.subr.mxu0 0.0
    %530 = vmatpush2.msra.mxu0 %v456
    %531 = vmatprep.subr.mxu0 0.0
    %532 = vmatpush2.msra.mxu0 %v455
    %533 = vmatprep.subr.mxu0 0.0
    %534 = vmatpush2.msra.mxu0 %v454
    %535 = vmatprep.subr.mxu0 0.0
    %536 = vmatpush2.msra.mxu0 %v453
    %537 = vmatprep.subr.mxu0 0.0
    %538 = vmatpush2.msra.mxu0 %v452
    %539 = vmatprep.mubr.f32.mxu0 %v403
    %540 = vmatmul.mubr.f32.gmra.mxu0 %v402
    %v541 = vpop.f32.mrf.mxu0
    %v542 = vadd.f32 %v473, %v541
    %v543 = vpop.f32.mrf.mxu0
    %544 = vdwg.mxu0
    %v545 = vmax.f32 %v542, 0.0
    %v546 = vld [vmem:[%s9] sm:$0xf]
    %v547 = vld [vmem:[%s9 + $0x4] sm:$0xf]
    %v548 = vld [vmem:[%s9 + $0x8] sm:$0xf]
    %v549 = vld [vmem:[%s9 + $0xc] sm:$0xf]
    %v550 = vld [vmem:[%s9 + $0x10] sm:$0xf]
    %v551 = vld [vmem:[%s9 + $0x14] sm:$0xf]
    %v552 = vld [vmem:[%s9 + $0x18] sm:$0xf]
    %v553 = vld [vmem:[%s9 + $0x1c] sm:$0xf]
    %v554 = vld [vmem:[%s9 + $0x20] sm:$0xf]
    %v555 = vld [vmem:[%s9 + $0x24] sm:$0xf]
    %v556 = vld [vmem:[%s9 + $0x28] sm:$0xf]
    %v557 = vld [vmem:[%s9 + $0x2c] sm:$0xf]
    %v558 = vld [vmem:[%s9 + $0x30] sm:$0xf]
    %v559 = vld [vmem:[%s9 + $0x34] sm:$0xf]
    %v560 = vld [vmem:[%s9 + $0x38] sm:$0xf]
    %v561 = vld [vmem:[%s9 + $0x3c] sm:$0xf]
    %v562 = vunpack.c.l.bf16 %v546
    %v563 = vunpack.c.l.bf16 %v547
    %v564 = vunpack.c.l.bf16 %v548
    %v565 = vunpack.c.l.bf16 %v549
    %v566 = vunpack.c.l.bf16 %v550
    %v567 = vunpack.c.l.bf16 %v551
    %v568 = vunpack.c.l.bf16 %v552
    %v569 = vunpack.c.l.bf16 %v553
    %v570 = vunpack.c.l.bf16 %v554
    %v571 = vunpack.c.l.bf16 %v555
    %v572 = vunpack.c.l.bf16 %v556
    %v573 = vunpack.c.l.bf16 %v557
    %v574 = vunpack.c.l.bf16 %v558
    %v575 = vunpack.c.l.bf16 %v559
    %v576 = vunpack.c.l.bf16 %v560
    %v577 = vunpack.c.l.bf16 %v561
    %v578 = vld [vmem:[%s10] sm:$0x1]
    %v580 = vlaneseq
    %v581 = vshrl.u32 %v580, 7
    %v582 = vsub.s32 0, %v581
    %v583 = vrot.slane %v578, %v582
    %585 = vmatprep.subr.mxu0 0.0
    %586 = vmatpush1.msra.mxu0 %v577
    %587 = vmatprep.subr.mxu0 0.0
    %588 = vmatpush1.msra.mxu0 %v576
    %589 = vmatprep.subr.mxu0 0.0
    %590 = vmatpush1.msra.mxu0 %v575
    %591 = vmatprep.subr.mxu0 0.0
    %592 = vmatpush1.msra.mxu0 %v574
    %593 = vmatprep.subr.mxu0 0.0
    %594 = vmatpush1.msra.mxu0 %v573
    %595 = vmatprep.subr.mxu0 0.0
    %596 = vmatpush1.msra.mxu0 %v572
    %597 = vmatprep.subr.mxu0 0.0
    %598 = vmatpush1.msra.mxu0 %v571
    %599 = vmatprep.subr.mxu0 0.0
    %600 = vmatpush1.msra.mxu0 %v570
    %601 = vmatprep.subr.mxu0 0.0
    %602 = vmatpush1.msra.mxu0 %v569
    %603 = vmatprep.subr.mxu0 0.0
    %604 = vmatpush1.msra.mxu0 %v568
    %605 = vmatprep.subr.mxu0 0.0
    %606 = vmatpush1.msra.mxu0 %v567
    %607 = vmatprep.subr.mxu0 0.0
    %608 = vmatpush1.msra.mxu0 %v566
    %609 = vmatprep.subr.mxu0 0.0
    %610 = vmatpush1.msra.mxu0 %v565
    %611 = vmatprep.subr.mxu0 0.0
    %612 = vmatpush1.msra.mxu0 %v564
    %613 = vmatprep.subr.mxu0 0.0
    %614 = vmatpush1.msra.mxu0 %v563
    %615 = vmatprep.subr.mxu0 0.0
    %616 = vmatpush1.msra.mxu0 %v562
    %617 = vmatprep.subr.mxu0 0.0
    %618 = vmatpush2.msra.mxu0 0.0
    %619 = vmatprep.subr.mxu0 0.0
    %620 = vmatpush2.msra.mxu0 0.0
    %621 = vmatprep.subr.mxu0 0.0
    %622 = vmatpush2.msra.mxu0 0.0
    %623 = vmatprep.subr.mxu0 0.0
    %624 = vmatpush2.msra.mxu0 0.0
    %625 = vmatprep.subr.mxu0 0.0
    %626 = vmatpush2.msra.mxu0 0.0
    %627 = vmatprep.subr.mxu0 0.0
    %628 = vmatpush2.msra.mxu0 0.0
    %629 = vmatprep.subr.mxu0 0.0
    %630 = vmatpush2.msra.mxu0 0.0
    %631 = vmatprep.subr.mxu0 0.0
    %632 = vmatpush2.msra.mxu0 0.0
    %633 = vmatprep.subr.mxu0 0.0
    %634 = vmatpush2.msra.mxu0 0.0
    %635 = vmatprep.subr.mxu0 0.0
    %636 = vmatpush2.msra.mxu0 0.0
    %637 = vmatprep.subr.mxu0 0.0
    %638 = vmatpush2.msra.mxu0 0.0
    %639 = vmatprep.subr.mxu0 0.0
    %640 = vmatpush2.msra.mxu0 0.0
    %641 = vmatprep.subr.mxu0 0.0
    %642 = vmatpush2.msra.mxu0 0.0
    %643 = vmatprep.subr.mxu0 0.0
    %644 = vmatpush2.msra.mxu0 0.0
    %645 = vmatprep.subr.mxu0 0.0
    %646 = vmatpush2.msra.mxu0 0.0
    %647 = vmatprep.subr.mxu0 0.0
    %648 = vmatpush2.msra.mxu0 0.0
    %649 = vmatprep.mubr.f32.mxu0 0.0
    %650 = vmatmul.mubr.f32.gmra.mxu0 %v545
    %v651 = vpop.f32.mrf.mxu0
    %v652 = vadd.f32 %v583, %v651
    %v653 = vpop.f32.mrf.mxu0
    %654 = vdwg.mxu0
    %v655 = vmax.f32 %v652, 0.0
    %v656 = vld [vmem:[%s11] sm:$0xf]
    %v657 = vld [vmem:[%s11 + $0x4] sm:$0xf]
    %v658 = vld [vmem:[%s11 + $0x8] sm:$0xf]
    %v659 = vld [vmem:[%s11 + $0xc] sm:$0xf]
    %v660 = vld [vmem:[%s11 + $0x10] sm:$0xf]
    %v661 = vld [vmem:[%s11 + $0x14] sm:$0xf]
    %v662 = vld [vmem:[%s11 + $0x18] sm:$0xf]
    %v663 = vld [vmem:[%s11 + $0x1c] sm:$0xf]
    %v664 = vld [vmem:[%s11 + $0x20] sm:$0xf]
    %v665 = vld [vmem:[%s11 + $0x24] sm:$0xf]
    %v666 = vld [vmem:[%s11 + $0x28] sm:$0xf]
    %v667 = vld [vmem:[%s11 + $0x2c] sm:$0xf]
    %v668 = vld [vmem:[%s11 + $0x30] sm:$0xf]
    %v669 = vld [vmem:[%s11 + $0x34] sm:$0xf]
    %v670 = vld [vmem:[%s11 + $0x38] sm:$0xf]
    %v671 = vld [vmem:[%s11 + $0x3c] sm:$0xf]
    %v672 = vunpack.c.l.bf16 %v656
    %v673 = vunpack.c.l.bf16 %v657
    %v674 = vunpack.c.l.bf16 %v658
    %v675 = vunpack.c.l.bf16 %v659
    %v676 = vunpack.c.l.bf16 %v660
    %v677 = vunpack.c.l.bf16 %v661
    %v678 = vunpack.c.l.bf16 %v662
    %v679 = vunpack.c.l.bf16 %v663
    %v680 = vunpack.c.l.bf16 %v664
    %v681 = vunpack.c.l.bf16 %v665
    %v682 = vunpack.c.l.bf16 %v666
    %v683 = vunpack.c.l.bf16 %v667
    %v684 = vunpack.c.l.bf16 %v668
    %v685 = vunpack.c.l.bf16 %v669
    %v686 = vunpack.c.l.bf16 %v670
    %v687 = vunpack.c.l.bf16 %v671
    %v688 = vld [vmem:[%s12] sm:$0x1]
    %v690 = vlaneseq
    %v691 = vshrl.u32 %v690, 7
    %v692 = vsub.s32 0, %v691
    %v693 = vrot.slane %v688, %v692
    %695 = vmatprep.subr.mxu0 0.0
    %696 = vmatpush1.msra.mxu0 %v687
    %697 = vmatprep.subr.mxu0 0.0
    %698 = vmatpush1.msra.mxu0 %v686
    %699 = vmatprep.subr.mxu0 0.0
    %700 = vmatpush1.msra.mxu0 %v685
    %701 = vmatprep.subr.mxu0 0.0
    %702 = vmatpush1.msra.mxu0 %v684
    %703 = vmatprep.subr.mxu0 0.0
    %704 = vmatpush1.msra.mxu0 %v683
    %705 = vmatprep.subr.mxu0 0.0
    %706 = vmatpush1.msra.mxu0 %v682
    %707 = vmatprep.subr.mxu0 0.0
    %708 = vmatpush1.msra.mxu0 %v681
    %709 = vmatprep.subr.mxu0 0.0
    %710 = vmatpush1.msra.mxu0 %v680
    %711 = vmatprep.subr.mxu0 0.0
    %712 = vmatpush1.msra.mxu0 %v679
    %713 = vmatprep.subr.mxu0 0.0
    %714 = vmatpush1.msra.mxu0 %v678
    %715 = vmatprep.subr.mxu0 0.0
    %716 = vmatpush1.msra.mxu0 %v677
    %717 = vmatprep.subr.mxu0 0.0
    %718 = vmatpush1.msra.mxu0 %v676
    %719 = vmatprep.subr.mxu0 0.0
    %720 = vmatpush1.msra.mxu0 %v675
    %721 = vmatprep.subr.mxu0 0.0
    %722 = vmatpush1.msra.mxu0 %v674
    %723 = vmatprep.subr.mxu0 0.0
    %724 = vmatpush1.msra.mxu0 %v673
    %725 = vmatprep.subr.mxu0 0.0
    %726 = vmatpush1.msra.mxu0 %v672
    %727 = vmatprep.subr.mxu0 0.0
    %728 = vmatpush2.msra.mxu0 0.0
    %729 = vmatprep.subr.mxu0 0.0
    %730 = vmatpush2.msra.mxu0 0.0
    %731 = vmatprep.subr.mxu0 0.0
    %732 = vmatpush2.msra.mxu0 0.0
    %733 = vmatprep.subr.mxu0 0.0
    %734 = vmatpush2.msra.mxu0 0.0
    %735 = vmatprep.subr.mxu0 0.0
    %736 = vmatpush2.msra.mxu0 0.0
    %737 = vmatprep.subr.mxu0 0.0
    %738 = vmatpush2.msra.mxu0 0.0
    %739 = vmatprep.subr.mxu0 0.0
    %740 = vmatpush2.msra.mxu0 0.0
    %741 = vmatprep.subr.mxu0 0.0
    %742 = vmatpush2.msra.mxu0 0.0
    %743 = vmatprep.subr.mxu0 0.0
    %744 = vmatpush2.msra.mxu0 0.0
    %745 = vmatprep.subr.mxu0 0.0
    %746 = vmatpush2.msra.mxu0 0.0
    %747 = vmatprep.subr.mxu0 0.0
    %748 = vmatpush2.msra.mxu0 0.0
    %749 = vmatprep.subr.mxu0 0.0
    %750 = vmatpush2.msra.mxu0 0.0
    %751 = vmatprep.subr.mxu0 0.0
    %752 = vmatpush2.msra.mxu0 0.0
    %753 = vmatprep.subr.mxu0 0.0
    %754 = vmatpush2.msra.mxu0 0.0
    %755 = vmatprep.subr.mxu0 0.0
    %756 = vmatpush2.msra.mxu0 0.0
    %757 = vmatprep.subr.mxu0 0.0
    %758 = vmatpush2.msra.mxu0 0.0
    %759 = vmatprep.mubr.f32.mxu0 0.0
    %760 = vmatmul.mubr.f32.gmra.mxu0 %v655
    %v761 = vpop.f32.mrf.mxu0
    %v762 = vadd.f32 %v693, %v761
    %v763 = vpop.f32.mrf.mxu0
    %764 = vdwg.mxu0
    %765 = vst [vmem:[%s13] sm:$0xff] %v762
    %v766 = vsel %vm302, %v281, %v288
    %vm767 = vcmask 1041408
    %v768 = vsel %vm767, %v766, 0.0
    %v769 = vsel %vm82, %v768, 0.0
    %770 = vst [vmem:[%s14] sm:$0xff] %v769
    // Predicated region
    $region62: #{cnn_forward.1} parent=1 // pred_check
      _
    $region63: #{cnn_forward.1} parent=1 // pred_check_branch
      %772 = sbr.rel (0) target = $region65
    $region64: #{cnn_forward.1} parent=1 // pred_region
      _
    $region65: #{cnn_forward.1} parent=1 // pred_fallthru
      _
    // Predicated region
    $region66: #{cnn_forward.1} parent=1 // pred_check
      _
    $region67: #{cnn_forward.1} parent=1 // pred_check_branch
      %774 = sbr.rel (0) target = $region69
    $region68: #{cnn_forward.1} parent=1 // pred_region
      _
    $region69: #{cnn_forward.1} parent=1 // pred_fallthru
      _
    // Predicated region
    $region70: #{cnn_forward.1} parent=1 // pred_check
      _
    $region71: #{cnn_forward.1} parent=1 // pred_check_branch
      %776 = sbr.rel (0) target = $region73
    $region72: #{cnn_forward.1} parent=1 // pred_region
      _
    $region73: #{cnn_forward.1} parent=1 // pred_fallthru
      _
    // Predicated region
    $region74: #{cnn_forward.1} parent=1 // pred_check
      _
    $region75: #{cnn_forward.1} parent=1 // pred_check_branch
      %778 = sbr.rel (0) target = $region77
    $region76: #{cnn_forward.1} parent=1 // pred_region
      _
    $region77: #{cnn_forward.1} parent=1 // pred_fallthru
      _
    %779 = vsyncpa [#allocation3], 1
    %780 = vsyncpa [#allocation4], 1

</llo_original>
